<compile_context>
chip_gen: v5e
topology: v5e:2x2
jax: 0.10.0
libtpu: 0.0.40
codegen_flags: <defaults>
</compile_context>

<pallas_src>
import functools

import jax
import jax.numpy as jnp
from jax.experimental import pallas as pl

LANE = 128  # TPU vreg lane width


def _fused_mlp_kernel(*refs, num_layers: int):
    """Fused MLP: refs = (x, w0, b0, w1, b1, ..., w_{L-1}, b_{L-1}, out).

    Hidden layers: y = relu(h @ W + b);  last layer: y = h @ W + b.
    Weights are bf16, accumulation and epilogue are f32.
    """
    x_ref = refs[0]
    o_ref = refs[-1]
    h = x_ref[...]  # (batch, in_dim) f32
    for i in range(num_layers):
        w_ref = refs[1 + 2 * i]  # (in_dim, out_dim) bf16
        b_ref = refs[2 + 2 * i]  # (1, out_dim) f32
        y = jnp.dot(h.astype(w_ref.dtype), w_ref[...],
                    preferred_element_type=jnp.float32)
        y = y + b_ref[...]
        if i != num_layers - 1:
            y = jnp.maximum(y, 0.0)
        h = y
    o_ref[...] = h.astype(o_ref.dtype)


def init_dqnn_params(key, obs_dim: int, act_dim: int,
                     hidden_sizes: tuple[int, ...]):
    """Deterministic params matching the PyTorch module's explicit init:
    kaiming_uniform_(weight, nonlinearity='relu') and zeros_(bias).
    Weights are stored transposed as (in_dim, out_dim), float32.
    """
    params = []
    dims = [obs_dim, *hidden_sizes, act_dim]
    for in_dim, out_dim in zip(dims[:-1], dims[1:]):
        key, sub = jax.random.split(key)
        gain = jnp.sqrt(2.0)
        bound = gain * jnp.sqrt(3.0 / in_dim)
        # PyTorch weight is (out_dim, in_dim); sample then transpose.
        w = jax.random.uniform(sub, (out_dim, in_dim), jnp.float32,
                               minval=-bound, maxval=bound)
        b = jnp.zeros((out_dim,), jnp.float32)
        params.append((w.T, b))
    return params


def prepare_params(params):
    """One-time packing for the fused kernel:
    - last layer's output dim zero-padded up to a multiple of 128 lanes,
    - weights cast to bf16,
    - biases reshaped to (1, out) f32 (hoisted out of the hot path)."""
    prepared = []
    n = len(params)
    for i, (w_t, b) in enumerate(params):
        out_dim = w_t.shape[1]
        if i == n - 1:
            pad_out = ((out_dim + LANE - 1) // LANE) * LANE
        else:
            pad_out = out_dim
        if pad_out != out_dim:
            w_t = jnp.pad(w_t, ((0, 0), (0, pad_out - out_dim)))
            b = jnp.pad(b, (0, pad_out - out_dim))
        prepared.append((w_t.astype(jnp.bfloat16),
                         b.reshape(1, pad_out).astype(jnp.float32)))
    return prepared


@functools.partial(jax.jit, static_argnames=("act_dim",))
def dqnn_forward(prepared_params, x, *, act_dim: int):
    """Single fused pallas_call for the whole MLP; returns (batch, act_dim)."""
    num_layers = len(prepared_params)
    batch = x.shape[0]
    out_pad = prepared_params[-1][0].shape[1]

    flat_inputs = [x]
    for w_t, b in prepared_params:
        flat_inputs.append(w_t)
        flat_inputs.append(b)

    kernel = functools.partial(_fused_mlp_kernel, num_layers=num_layers)
    out_padded = pl.pallas_call(
        kernel,
        out_shape=jax.ShapeDtypeStruct((batch, out_pad), jnp.float32),
    )(*flat_inputs)
    return out_padded[:, :act_dim]


if __name__ == "__main__":
    obs_dim = 16
    act_dim = 4
    hidden_sizes = (128, 64)
    batch = 8

    key = jax.random.PRNGKey(0)
    key, xkey = jax.random.split(key)
    x = jax.random.normal(xkey, (batch, obs_dim), jnp.float32)

    params = init_dqnn_params(key, obs_dim, act_dim, hidden_sizes)
    prepared = prepare_params(params)

    q_values = dqnn_forward(prepared, x, act_dim=act_dim)
    q_values = jax.block_until_ready(q_values)

    # Reference: same math (bf16 weights, f32 accumulation) in plain JAX.
    ref = x
    for i, (w_t, b) in enumerate(params):
        ref = jnp.dot(ref.astype(jnp.bfloat16), w_t.astype(jnp.bfloat16),
                      preferred_element_type=jnp.float32) + b
        if i != len(params) - 1:
            ref = jnp.maximum(ref, 0.0)

    assert q_values.shape == (batch, act_dim)
    assert jnp.allclose(q_values, ref, atol=1e-2, rtol=1e-2), (
        jnp.max(jnp.abs(q_values - ref)))

    print("KERNEL_OK")
</pallas_src>

<mosaic_0001>
module attributes {stable_mosaic.version = 11 : i64} {
  func.func @_fused_mlp_kernel(%arg0: memref<8x16xf32, #tpu.memory_space<vmem>>, %arg1: memref<16x128xbf16, #tpu.memory_space<vmem>>, %arg2: memref<1x128xf32, #tpu.memory_space<vmem>>, %arg3: memref<128x64xbf16, #tpu.memory_space<vmem>>, %arg4: memref<1x64xf32, #tpu.memory_space<vmem>>, %arg5: memref<64x128xbf16, #tpu.memory_space<vmem>>, %arg6: memref<1x128xf32, #tpu.memory_space<vmem>>, %arg7: memref<8x128xf32, #tpu.memory_space<vmem>>) attributes {dimension_semantics = [], scalar_prefetch = 0 : i64, scratch_operands = 0 : i64, tpu.core_type = #tpu.core_type<tc>} {
    %c0 = arith.constant 0 : index
    %c0_0 = arith.constant 0 : index
    %0 = vector.load %arg0[%c0, %c0_0] : memref<8x16xf32, #tpu.memory_space<vmem>>, vector<8x16xf32>
    %1 = arith.truncf %0 : vector<8x16xf32> to vector<8x16xbf16>
    %c0_1 = arith.constant 0 : index
    %c0_2 = arith.constant 0 : index
    %2 = vector.load %arg1[%c0_1, %c0_2] : memref<16x128xbf16, #tpu.memory_space<vmem>>, vector<16x128xbf16>
    %cst = arith.constant dense<0.000000e+00> : vector<8x128xf32>
    %3 = tpu.matmul %1, %2, %cst {dimension_numbers = #tpu.dot_dimension_numbers<[1], [0], [0], [1], [0, 0, 1, 1], [], []>} : vector<8x16xbf16>, vector<16x128xbf16>, vector<8x128xf32> -> vector<8x128xf32>
    %c0_3 = arith.constant 0 : index
    %c0_4 = arith.constant 0 : index
    %4 = vector.load %arg2[%c0_3, %c0_4] : memref<1x128xf32, #tpu.memory_space<vmem>>, vector<1x128xf32>
    %5 = vector.broadcast %4 : vector<1x128xf32> to vector<8x128xf32>
    %6 = arith.addf %3, %5 : vector<8x128xf32>
    %cst_5 = arith.constant 0.000000e+00 : f32
    %7 = vector.broadcast %cst_5 : f32 to vector<8x128xf32>
    %8 = arith.maximumf %6, %7 : vector<8x128xf32>
    %9 = arith.truncf %8 : vector<8x128xf32> to vector<8x128xbf16>
    %c0_6 = arith.constant 0 : index
    %c0_7 = arith.constant 0 : index
    %10 = vector.load %arg3[%c0_6, %c0_7] : memref<128x64xbf16, #tpu.memory_space<vmem>>, vector<128x64xbf16>
    %cst_8 = arith.constant dense<0.000000e+00> : vector<8x64xf32>
    %11 = tpu.matmul %9, %10, %cst_8 {dimension_numbers = #tpu.dot_dimension_numbers<[1], [0], [0], [1], [0, 0, 1, 1], [], []>} : vector<8x128xbf16>, vector<128x64xbf16>, vector<8x64xf32> -> vector<8x64xf32>
    %c0_9 = arith.constant 0 : index
    %c0_10 = arith.constant 0 : index
    %12 = vector.load %arg4[%c0_9, %c0_10] : memref<1x64xf32, #tpu.memory_space<vmem>>, vector<1x64xf32>
    %13 = vector.broadcast %12 : vector<1x64xf32> to vector<8x64xf32>
    %14 = arith.addf %11, %13 : vector<8x64xf32>
    %cst_11 = arith.constant 0.000000e+00 : f32
    %15 = vector.broadcast %cst_11 : f32 to vector<8x64xf32>
    %16 = arith.maximumf %14, %15 : vector<8x64xf32>
    %17 = arith.truncf %16 : vector<8x64xf32> to vector<8x64xbf16>
    %c0_12 = arith.constant 0 : index
    %c0_13 = arith.constant 0 : index
    %18 = vector.load %arg5[%c0_12, %c0_13] : memref<64x128xbf16, #tpu.memory_space<vmem>>, vector<64x128xbf16>
    %cst_14 = arith.constant dense<0.000000e+00> : vector<8x128xf32>
    %19 = tpu.matmul %17, %18, %cst_14 {dimension_numbers = #tpu.dot_dimension_numbers<[1], [0], [0], [1], [0, 0, 1, 1], [], []>} : vector<8x64xbf16>, vector<64x128xbf16>, vector<8x128xf32> -> vector<8x128xf32>
    %c0_15 = arith.constant 0 : index
    %c0_16 = arith.constant 0 : index
    %20 = vector.load %arg6[%c0_15, %c0_16] : memref<1x128xf32, #tpu.memory_space<vmem>>, vector<1x128xf32>
    %21 = vector.broadcast %20 : vector<1x128xf32> to vector<8x128xf32>
    %22 = arith.addf %19, %21 : vector<8x128xf32>
    %c0_17 = arith.constant 0 : index
    %c0_18 = arith.constant 0 : index
    %23 = vector.load %arg7[%c0_17, %c0_18] : memref<8x128xf32, #tpu.memory_space<vmem>>, vector<8x128xf32>
    tpu.vector_store %arg7[%c0_17, %c0_18], %22 {strides = array<i32>} : memref<8x128xf32, #tpu.memory_space<vmem>>, vector<8x128xf32>,
    return
  }
}

</mosaic_0001>

<llo_original>
// kernel: dqnn_forward.1
$region0: #{dqnn_forward.1}
  #allocation0 [shape = 'u32[]', space=smem, size = 0x4, offset = 0x4, fixed_abs, tag = 'smem constant byte address 0x4 - core index']
  #allocation1 [shape = 'u32[72,128]{1,0:T(1,128)}', space=vmem, size = 0x9000, scoped, tag = 'internal scratch']
  %s0 = inlined_call_operand.vmem [shape: f32[8,16], index: 0, kind: input, shape index: {}]
  %s1 = inlined_call_operand.vmem [shape: bf16[16,128], index: 1, kind: input, shape index: {}]
  %s2 = inlined_call_operand.vmem [shape: f32[1,128], index: 2, kind: input, shape index: {}]
  %s3 = inlined_call_operand.vmem [shape: bf16[128,64], index: 3, kind: input, shape index: {}]
  %s4 = inlined_call_operand.vmem [shape: f32[1,64], index: 4, kind: input, shape index: {}]
  %s5 = inlined_call_operand.vmem [shape: bf16[64,128], index: 5, kind: input, shape index: {}]
  %s6 = inlined_call_operand.vmem [shape: f32[1,128], index: 6, kind: input, shape index: {}]
  %s7 = inlined_call_operand.vmem [shape: f32[8,128], index: 7, kind: output, shape index: {}]
  %s8 = sld [smem:[#allocation0]]
  $region38: #{dqnn_forward.1} parent=0
    _
  %s10 = ssub.s32 1, %s8
  %s11 = scalar_select 0, %s10, %s8
  // Predicated region
  $region2: #{dqnn_forward.1} parent=0 // pred_check
    _
  $region3: #{dqnn_forward.1} parent=0 // pred_check_branch
    %13 = sbr.rel (0) target = $region5
  $region4: #{dqnn_forward.1} parent=0 // pred_region
    _
  $region5: #{dqnn_forward.1} parent=0 // pred_fallthru
    _
  // Predicated region
  $region6: #{dqnn_forward.1} parent=0 // pred_check
    _
  $region7: #{dqnn_forward.1} parent=0 // pred_check_branch
    %15 = sbr.rel (0) target = $region9
  $region8: #{dqnn_forward.1} parent=0 // pred_region
    _
  $region9: #{dqnn_forward.1} parent=0 // pred_fallthru
    _
  // Predicated region
  $region10: #{dqnn_forward.1} parent=0 // pred_check
    _
  $region11: #{dqnn_forward.1} parent=0 // pred_check_branch
    %17 = sbr.rel (0) target = $region13
  $region12: #{dqnn_forward.1} parent=0 // pred_region
    _
  $region13: #{dqnn_forward.1} parent=0 // pred_fallthru
    _
  // Predicated region
  $region14: #{dqnn_forward.1} parent=0 // pred_check
    _
  $region15: #{dqnn_forward.1} parent=0 // pred_check_branch
    %19 = sbr.rel (0) target = $region17
  $region16: #{dqnn_forward.1} parent=0 // pred_region
    _
  $region17: #{dqnn_forward.1} parent=0 // pred_fallthru
    _
  // Predicated region
  $region18: #{dqnn_forward.1} parent=0 // pred_check
    _
  $region19: #{dqnn_forward.1} parent=0 // pred_check_branch
    %21 = sbr.rel (0) target = $region21
  $region20: #{dqnn_forward.1} parent=0 // pred_region
    _
  $region21: #{dqnn_forward.1} parent=0 // pred_fallthru
    _
  // Predicated region
  $region22: #{dqnn_forward.1} parent=0 // pred_check
    _
  $region23: #{dqnn_forward.1} parent=0 // pred_check_branch
    %23 = sbr.rel (0) target = $region25
  $region24: #{dqnn_forward.1} parent=0 // pred_region
    _
  $region25: #{dqnn_forward.1} parent=0 // pred_fallthru
    _
  // Predicated region
  $region26: #{dqnn_forward.1} parent=0 // pred_check
    _
  $region27: #{dqnn_forward.1} parent=0 // pred_check_branch
    %25 = sbr.rel (0) target = $region29
  $region28: #{dqnn_forward.1} parent=0 // pred_region
    _
  $region29: #{dqnn_forward.1} parent=0 // pred_fallthru
    _
  %v27 = vld [vmem:[%s0] sm:$0xff]
  %v28 = vpack.c.bf16 %v27, %v27
  %v29 = vld [vmem:[%s1] sm:$0xf]
  %v30 = vld [vmem:[%s1 + $0x4] sm:$0xf]
  %v31 = vld [vmem:[%s2] sm:$0x1]
  %v33 = vperm.slane %v31, 0
  %v37 = vunpack.c.l.b16 %v29
  %v38 = vunpack.c.l.b16 %v30
  %v39 = vpack.c.b16 %v38, %v37
  %vm41 = vcmask 130048
  %v43 = vsel %vm41, %v28, 0
  %45 = vmatpush.bf16.msra.mxu0 0
  %46 = vmatpush.bf16.msra.mxu0 0
  %47 = vmatpush.bf16.msra.mxu0 0
  %48 = vmatpush.bf16.msra.mxu0 0
  %49 = vmatpush.bf16.msra.mxu0 0
  %50 = vmatpush.bf16.msra.mxu0 0
  %51 = vmatpush.bf16.msra.mxu0 0
  %52 = vmatpush.bf16.msra.mxu0 %v39
  %53 = vmatmul.bf16.gmra.mxu0 %v43
  %v54 = vpop.f32.mrf.mxu0
  %v55 = vadd.f32 %v33, %v54
  %v56 = vpop.f32.mrf.mxu0
  %57 = vdwg.mxu0
  %v58 = vmax.f32 %v55, 0.0
  %v59 = vpack.c.bf16 %v58, %v58
  %v60 = vld [vmem:[%s3] sm:$0xf]
  %v61 = vld [vmem:[%s3 + $0x4] sm:$0xf]
  %v62 = vld [vmem:[%s3 + $0x8] sm:$0xf]
  %v63 = vld [vmem:[%s3 + $0xc] sm:$0xf]
  %v64 = vld [vmem:[%s3 + $0x10] sm:$0xf]
  %v65 = vld [vmem:[%s3 + $0x14] sm:$0xf]
  %v66 = vld [vmem:[%s3 + $0x18] sm:$0xf]
  %v67 = vld [vmem:[%s3 + $0x1c] sm:$0xf]
  %v68 = vld [vmem:[%s3 + $0x20] sm:$0xf]
  %v69 = vld [vmem:[%s3 + $0x24] sm:$0xf]
  %v70 = vld [vmem:[%s3 + $0x28] sm:$0xf]
  %v71 = vld [vmem:[%s3 + $0x2c] sm:$0xf]
  %v72 = vld [vmem:[%s3 + $0x30] sm:$0xf]
  %v73 = vld [vmem:[%s3 + $0x34] sm:$0xf]
  %v74 = vld [vmem:[%s3 + $0x38] sm:$0xf]
  %v75 = vld [vmem:[%s3 + $0x3c] sm:$0xf]
  %v76 = vld [vmem:[%s4] sm:$0x1]
  %v78 = vperm.slane %v76, 0
  %v96 = vunpack.c.l.b16 %v60
  %v97 = vunpack.c.l.b16 %v61
  %v98 = vunpack.c.l.b16 %v62
  %v99 = vunpack.c.l.b16 %v63
  %v100 = vunpack.c.l.b16 %v64
  %v101 = vunpack.c.l.b16 %v65
  %v102 = vunpack.c.l.b16 %v66
  %v103 = vunpack.c.l.b16 %v67
  %v104 = vunpack.c.l.b16 %v68
  %v105 = vunpack.c.l.b16 %v69
  %v106 = vunpack.c.l.b16 %v70
  %v107 = vunpack.c.l.b16 %v71
  %v108 = vunpack.c.l.b16 %v72
  %v109 = vunpack.c.l.b16 %v73
  %v110 = vunpack.c.l.b16 %v74
  %v111 = vunpack.c.l.b16 %v75
  %v112 = vpack.c.b16 %v97, %v96
  %v113 = vpack.c.b16 %v99, %v98
  %v114 = vpack.c.b16 %v101, %v100
  %v115 = vpack.c.b16 %v103, %v102
  %v116 = vpack.c.b16 %v105, %v104
  %v117 = vpack.c.b16 %v107, %v106
  %v118 = vpack.c.b16 %v109, %v108
  %v119 = vpack.c.b16 %v111, %v110
  %128 = vmatpush.bf16.msra.mxu0 %v119
  %129 = vmatpush.bf16.msra.mxu0 %v118
  %130 = vmatpush.bf16.msra.mxu0 %v117
  %131 = vmatpush.bf16.msra.mxu0 %v116
  %132 = vmatpush.bf16.msra.mxu0 %v115
  %133 = vmatpush.bf16.msra.mxu0 %v114
  %134 = vmatpush.bf16.msra.mxu0 %v113
  %135 = vmatpush.bf16.msra.mxu0 %v112
  %136 = vmatmul.bf16.gmra.mxu0 %v59
  %v137 = vpop.f32.mrf.mxu0
  %v138 = vadd.f32 %v78, %v137
  %v139 = vpop.f32.mrf.mxu0
  %140 = vdwg.mxu0
  %v141 = vmax.f32 %v138, 0.0
  %v142 = vpack.c.bf16 %v141, %v141
  %v143 = vld [vmem:[%s5] sm:$0xf]
  %v144 = vld [vmem:[%s5 + $0x4] sm:$0xf]
  %v145 = vld [vmem:[%s5 + $0x8] sm:$0xf]
  %v146 = vld [vmem:[%s5 + $0xc] sm:$0xf]
  %v147 = vld [vmem:[%s5 + $0x10] sm:$0xf]
  %v148 = vld [vmem:[%s5 + $0x14] sm:$0xf]
  %v149 = vld [vmem:[%s5 + $0x18] sm:$0xf]
  %v150 = vld [vmem:[%s5 + $0x1c] sm:$0xf]
  %v151 = vld [vmem:[%s6] sm:$0x1]
  %v153 = vperm.slane %v151, 0
  %v163 = vunpack.c.l.b16 %v143
  %v164 = vunpack.c.l.b16 %v144
  %v165 = vunpack.c.l.b16 %v145
  %v166 = vunpack.c.l.b16 %v146
  %v167 = vunpack.c.l.b16 %v147
  %v168 = vunpack.c.l.b16 %v148
  %v169 = vunpack.c.l.b16 %v149
  %v170 = vunpack.c.l.b16 %v150
  %v171 = vpack.c.b16 %v164, %v163
  %v172 = vpack.c.b16 %v166, %v165
  %v173 = vpack.c.b16 %v168, %v167
  %v174 = vpack.c.b16 %v170, %v169
  %vm179 = vcmask 523264
  %v181 = vsel %vm179, %v142, 0
  %183 = vmatpush.bf16.msra.mxu0 0
  %184 = vmatpush.bf16.msra.mxu0 0
  %185 = vmatpush.bf16.msra.mxu0 0
  %186 = vmatpush.bf16.msra.mxu0 0
  %187 = vmatpush.bf16.msra.mxu0 %v174
  %188 = vmatpush.bf16.msra.mxu0 %v173
  %189 = vmatpush.bf16.msra.mxu0 %v172
  %190 = vmatpush.bf16.msra.mxu0 %v171
  %191 = vmatmul.bf16.gmra.mxu0 %v181
  %v192 = vpop.f32.mrf.mxu0
  %v193 = vadd.f32 %v153, %v192
  %v194 = vpop.f32.mrf.mxu0
  %195 = vdwg.mxu0
  %196 = vst [vmem:[%s7] sm:$0xff] %v193
  // Predicated region
  $region30: #{dqnn_forward.1} parent=0 // pred_check
    _
  $region31: #{dqnn_forward.1} parent=0 // pred_check_branch
    %198 = sbr.rel (0) target = $region33
  $region32: #{dqnn_forward.1} parent=0 // pred_region
    _
  $region33: #{dqnn_forward.1} parent=0 // pred_fallthru
    _
  // Predicated region
  $region34: #{dqnn_forward.1} parent=0 // pred_check
    _
  $region35: #{dqnn_forward.1} parent=0 // pred_check_branch
    %200 = sbr.rel (0) target = $region37
  $region36: #{dqnn_forward.1} parent=0 // pred_region
    _
  $region37: #{dqnn_forward.1} parent=0 // pred_fallthru
    _

</llo_original>
